<compile_context>
chip_gen: v5e
topology: v5e:2x2
jax: 0.10.0
libtpu: 0.0.40
codegen_flags: <defaults>
</compile_context>

<pallas_src>
import functools
import math

import jax
import jax.numpy as jnp
from jax.experimental import pallas as pl
from jax.experimental.pallas import tpu as pltpu


def _round_up(x, m):
    return ((x + m - 1) // m) * m


def _prenet_kernel(seed_ref, x_ref, w1_ref, w2_ref, o_ref, *, training):
    # seed_ref: (1,) int32 scalar-prefetch (SMEM)
    # x_ref:    (tile_m, in_dim)   input rows, original (unpadded) feature dim
    # w1_ref:   (in_dim, H_pad)    layer-1 weight, already transposed (out = x @ w1)
    # w2_ref:   (H_pad, H_pad)     layer-2 weight, already transposed
    # o_ref:    (tile_m, H_pad)
    cd = w1_ref.dtype  # MXU operand dtype (bf16 by default), accumulation is f32

    # Layer 1: matmul (f32 accumulate) + ReLU in the f32 accumulator.
    h = jnp.dot(x_ref[...].astype(cd), w1_ref[...],
                preferred_element_type=jnp.float32)
    h = jnp.maximum(h, 0.0)

    if training:
        # Dropout(p=0.5), inverted scaling by 1/(1-p) = 2.0.
        # Seed mixes the per-call seed with the tile id -> independent stream per tile.
        pltpu.prng_seed(seed_ref[0], pl.program_id(0))
        bits1 = pltpu.prng_random_bits(h.shape)
        if bits1.dtype != jnp.uint32:
            bits1 = pltpu.bitcast(bits1, jnp.uint32)
        keep1 = bits1 < jnp.uint32(0x80000000)   # top-bit threshold, not the LSB
        h = jnp.where(keep1, h * 2.0, 0.0)

    # Layer 2.
    y = jnp.dot(h.astype(cd), w2_ref[...], preferred_element_type=jnp.float32)
    y = jnp.maximum(y, 0.0)

    if training:
        bits2 = pltpu.prng_random_bits(y.shape)
        if bits2.dtype != jnp.uint32:
            bits2 = pltpu.bitcast(bits2, jnp.uint32)
        keep2 = bits2 < jnp.uint32(0x80000000)
        y = jnp.where(keep2, y * 2.0, 0.0)

    o_ref[...] = y.astype(o_ref.dtype)


def prepare_params(w1, w2, compute_dtype=jnp.bfloat16):
    """One-time conversion of PyTorch-layout weights into kernel layout.

    w1: (prenet_dim, in_dim), w2: (prenet_dim, prenet_dim)  -- torch Linear layout.
    Returns w1_t: (in_dim, H_pad), w2_t: (H_pad, H_pad) in `compute_dtype`,
    lane-padded to a multiple of 128 on the output axis.  Call once at init so the
    transpose/pad/cast never re-runs in the decode hot loop.
    """
    H, in_dim = w1.shape
    assert w2.shape == (H, H)
    H_pad = _round_up(H, 128)
    w1_t = jnp.zeros((in_dim, H_pad), compute_dtype).at[:, :H].set(
        w1.T.astype(compute_dtype))
    w2_t = jnp.zeros((H_pad, H_pad), compute_dtype).at[:H, :H].set(
        w2.T.astype(compute_dtype))
    return w1_t, w2_t


def _pick_tile_m(M):
    # Small M (decode step): one grid step.  The kernel is weight-DMA/latency bound,
    # so splitting across TensorCores only duplicates the weight fetch + step cost.
    if M <= 256:
        return _round_up(M, 8)
    # Medium M: two 256-aligned steps (matches the 256x256 MXU on v6e/v7x and feeds
    # both cores through the "parallel" grid axis).
    if M <= 2048:
        return _round_up(pl.cdiv(M, 2), 256)
    # Large M: big lane-dense tiles; per-step overhead amortized, VMEM still tiny.
    return 1024


def prenet_forward(x, w1_t, w2_t, *, training=False, dropout_seed=0,
                   out_dim=None, out_dtype=None):
    """Fused Prenet forward.

    x:    (..., in_dim)
    w1_t: (in_dim, H_pad), w2_t: (H_pad, H_pad)  -- from prepare_params().
    training=False -> Dropout is identity (eval mode; matches the reference).
    training=True  -> Dropout(0.5) via the in-kernel TPU hardware PRNG (distributional
                      semantics match PyTorch; the random stream differs).
    out_dtype: output dtype (default x.dtype); pass jnp.bfloat16 to halve the HBM
               write if the downstream decoder accepts it.
    """
    lead_shape = x.shape[:-1]
    in_dim = x.shape[-1]
    H_pad = w1_t.shape[1]
    assert w1_t.shape == (in_dim, H_pad)
    assert w2_t.shape == (H_pad, H_pad)
    out_dim = H_pad if out_dim is None else out_dim
    out_dtype = x.dtype if out_dtype is None else out_dtype

    M = 1
    for d in lead_shape:
        M *= int(d)
    M = max(M, 1)

    tile_m = _pick_tile_m(M)
    num_tiles = pl.cdiv(M, tile_m)

    # No padding copies: reshape is a view-level op; a partial last tile is fine since
    # rows are independent through both matmuls and only valid rows are written back.
    x2 = x.reshape(M, in_dim)
    seed = jnp.asarray([dropout_seed], dtype=jnp.int32)

    kernel = functools.partial(_prenet_kernel, training=training)

    out = pl.pallas_call(
        kernel,
        out_shape=jax.ShapeDtypeStruct((M, H_pad), out_dtype),
        grid_spec=pltpu.PrefetchScalarGridSpec(
            num_scalar_prefetch=1,
            grid=(num_tiles,),
            in_specs=[
                # x: last dim equals the full array dim -> no lane padding needed.
                pl.BlockSpec((tile_m, in_dim), lambda i, _seed: (i, 0)),
                # Weights: constant index_map, fetched once and kept resident in VMEM.
                pl.BlockSpec((in_dim, H_pad), lambda i, _seed: (0, 0)),
                pl.BlockSpec((H_pad, H_pad), lambda i, _seed: (0, 0)),
            ],
            out_specs=pl.BlockSpec((tile_m, H_pad), lambda i, _seed: (i, 0)),
        ),
        compiler_params=pltpu.CompilerParams(
            dimension_semantics=("parallel",)),
    )(seed, x2, w1_t, w2_t)

    if out_dim != H_pad:
        out = out[:, :out_dim]
    return out.reshape(lead_shape + (out_dim,))


def _reference_forward(x, w1, w2, compute_dtype=jnp.float32):
    """Pure-JAX eval-mode reference (dropout = identity), mirroring kernel dtypes."""
    cd = compute_dtype
    hi = jax.lax.Precision.HIGHEST
    h = jnp.einsum("...i,hi->...h", x.astype(cd), w1.astype(cd),
                   preferred_element_type=jnp.float32, precision=hi)
    h = jnp.maximum(h, 0.0)
    y = jnp.einsum("...h,oh->...o", h.astype(cd), w2.astype(cd),
                   preferred_element_type=jnp.float32, precision=hi)
    y = jnp.maximum(y, 0.0)
    return y.astype(x.dtype)


def init_params(key, in_dim, prenet_dim):
    """Mirror the PyTorch init: xavier_normal_, gain('linear') = 1.0, bias=False."""
    k1, k2 = jax.random.split(key)
    std1 = math.sqrt(2.0 / (in_dim + prenet_dim))
    w1 = std1 * jax.random.normal(k1, (prenet_dim, in_dim), jnp.float32)
    std2 = math.sqrt(2.0 / (prenet_dim + prenet_dim))
    w2 = std2 * jax.random.normal(k2, (prenet_dim, prenet_dim), jnp.float32)
    return w1, w2


if __name__ == "__main__":
    B, T = 2, 16
    in_dim = 80          # n_mel_channels (Tacotron2 default decoder input)
    prenet_dim = 256

    key = jax.random.PRNGKey(0)
    k_x, k_p = jax.random.split(key)
    x = jax.random.normal(k_x, (B, T, in_dim), dtype=jnp.float32)
    w1, w2 = init_params(k_p, in_dim, prenet_dim)

    # ---- Eval mode (Dropout = identity) ----
    # f32 MXU-operand path: tight parity with the pure-JAX reference.
    w1_f32, w2_f32 = prepare_params(w1, w2, compute_dtype=jnp.float32)
    out_f32 = jax.block_until_ready(prenet_forward(x, w1_f32, w2_f32, training=False))
    ref_f32 = _reference_forward(x, w1, w2, compute_dtype=jnp.float32)
    assert out_f32.shape == (B, T, prenet_dim)
    assert jnp.allclose(out_f32, ref_f32, atol=1e-3, rtol=1e-3)

    # bf16 MXU-operand path (default / fastest), f32 accumulation in-kernel.
    w1_bf, w2_bf = prepare_params(w1, w2, compute_dtype=jnp.bfloat16)
    out_bf = jax.block_until_ready(prenet_forward(x, w1_bf, w2_bf, training=False))
    ref_bf = _reference_forward(x, w1, w2, compute_dtype=jnp.bfloat16)
    assert out_bf.shape == (B, T, prenet_dim)
    assert jnp.allclose(out_bf, ref_bf, atol=2e-2, rtol=2e-2)

    # ---- Training mode (Dropout(0.5) via the TPU hardware PRNG) ----
    # The stateful hardware PRNG only lowers on a real TPU backend, so only demo it
    # there (the eval path above never touches it).
    if jax.devices()[0].platform == "tpu":
        out_tr = jax.block_until_ready(
            prenet_forward(x, w1_bf, w2_bf, training=True, dropout_seed=1234))
        assert out_tr.shape == (B, T, prenet_dim)
        assert bool(jnp.all(jnp.isfinite(out_tr)))
        assert bool(jnp.all(out_tr >= 0.0))        # survivors are 2x a ReLU output
        assert not jnp.allclose(out_tr, out_bf)    # dropout actually dropped something
    # TODO(synk): PyTorch's exact Dropout RNG stream is not reproducible on the TPU
    # hardware PRNG; only the Bernoulli(0.5)/scale-by-2 semantics are matched.

    print("KERNEL_OK")
</pallas_src>

<mosaic_0001>
module attributes {stable_mosaic.version = 11 : i64} {
  func.func @_prenet_kernel(%arg0: i32, %arg1: memref<1xi32, #tpu.memory_space<smem>>, %arg2: memref<32x80xf32, #tpu.memory_space<vmem>>, %arg3: memref<80x256xf32, #tpu.memory_space<vmem>>, %arg4: memref<256x256xf32, #tpu.memory_space<vmem>>, %arg5: memref<32x256xf32, #tpu.memory_space<vmem>>) attributes {dimension_semantics = [#tpu.dimension_semantics<parallel>], iteration_bounds = array<i64: 1>, scalar_prefetch = 1 : i64, scratch_operands = 0 : i64, tpu.core_type = #tpu.core_type<tc>, window_params = [{transform_indices = @transform_0, window_bounds = array<i64: 32, 80>}, {pipeline_mode = #tpu.pipeline_mode<synchronous>, transform_indices = @transform_1, window_bounds = array<i64: 80, 256>}, {pipeline_mode = #tpu.pipeline_mode<synchronous>, transform_indices = @transform_2, window_bounds = array<i64: 256, 256>}, {transform_indices = @transform_3, window_bounds = array<i64: 32, 256>}]} {
    %c0 = arith.constant 0 : index
    %c0_0 = arith.constant 0 : index
    %0 = vector.load %arg2[%c0, %c0_0] : memref<32x80xf32, #tpu.memory_space<vmem>>, vector<32x80xf32>
    %c0_1 = arith.constant 0 : index
    %c0_2 = arith.constant 0 : index
    %1 = vector.load %arg3[%c0_1, %c0_2] : memref<80x256xf32, #tpu.memory_space<vmem>>, vector<80x256xf32>
    %cst = arith.constant dense<0.000000e+00> : vector<32x256xf32>
    %2 = tpu.matmul %0, %1, %cst {dimension_numbers = #tpu.dot_dimension_numbers<[1], [0], [0], [1], [0, 0, 1, 1], [], []>} : vector<32x80xf32>, vector<80x256xf32>, vector<32x256xf32> -> vector<32x256xf32>
    %cst_3 = arith.constant 0.000000e+00 : f32
    %3 = vector.broadcast %cst_3 : f32 to vector<32x256xf32>
    %4 = arith.maximumf %2, %3 : vector<32x256xf32>
    %c0_4 = arith.constant 0 : index
    %c0_5 = arith.constant 0 : index
    %5 = vector.load %arg4[%c0_4, %c0_5] : memref<256x256xf32, #tpu.memory_space<vmem>>, vector<256x256xf32>
    %cst_6 = arith.constant dense<0.000000e+00> : vector<32x256xf32>
    %6 = tpu.matmul %4, %5, %cst_6 {dimension_numbers = #tpu.dot_dimension_numbers<[1], [0], [0], [1], [0, 0, 1, 1], [], []>} : vector<32x256xf32>, vector<256x256xf32>, vector<32x256xf32> -> vector<32x256xf32>
    %cst_7 = arith.constant 0.000000e+00 : f32
    %7 = vector.broadcast %cst_7 : f32 to vector<32x256xf32>
    %8 = arith.maximumf %6, %7 : vector<32x256xf32>
    %c0_8 = arith.constant 0 : index
    %c0_9 = arith.constant 0 : index
    %9 = vector.load %arg5[%c0_8, %c0_9] : memref<32x256xf32, #tpu.memory_space<vmem>>, vector<32x256xf32>
    tpu.vector_store %arg5[%c0_8, %c0_9], %8 {strides = array<i32>} : memref<32x256xf32, #tpu.memory_space<vmem>>, vector<32x256xf32>,
    return
  }
  func.func @transform_0(%arg0: i32, %arg1: memref<1xi32, #tpu.memory_space<smem>>) -> (i32, i32) {
    %c0_i32 = arith.constant 0 : i32
    %c0_i32_0 = arith.constant 0 : i32
    return %arg0, %c0_i32 : i32, i32
  }
  func.func @transform_1(%arg0: i32, %arg1: memref<1xi32, #tpu.memory_space<smem>>) -> (i32, i32) {
    %c0_i32 = arith.constant 0 : i32
    %c0_i32_0 = arith.constant 0 : i32
    %c0_i32_1 = arith.constant 0 : i32
    return %c0_i32, %c0_i32_0 : i32, i32
  }
  func.func @transform_2(%arg0: i32, %arg1: memref<1xi32, #tpu.memory_space<smem>>) -> (i32, i32) {
    %c0_i32 = arith.constant 0 : i32
    %c0_i32_0 = arith.constant 0 : i32
    %c0_i32_1 = arith.constant 0 : i32
    return %c0_i32, %c0_i32_0 : i32, i32
  }
  func.func @transform_3(%arg0: i32, %arg1: memref<1xi32, #tpu.memory_space<smem>>) -> (i32, i32) {
    %c0_i32 = arith.constant 0 : i32
    %c0_i32_0 = arith.constant 0 : i32
    return %arg0, %c0_i32 : i32, i32
  }
}

</mosaic_0001>

<llo_original>
// kernel: tpu_custom_call.1
$region0: #{tpu_custom_call.1}
  #allocation0 [shape = 'u32[]', space=smem, size = 0x4, offset = 0x4, fixed_abs, tag = 'smem constant byte address 0x4 - core index']
  #allocation1 [shape = 'u32[72,128]{1,0:T(1,128)}', space=vmem, size = 0x9000, scoped, tag = 'internal scratch']
  #allocation2 [shape = 's32[1]{0}', space=sflag, size = 0x4, scoped, tag = 'scoped memory for tpu_custom_call.1']
  #allocation3 [shape = 's32[1]{0:T(128)S(6)}', space=smem, size = 0x200, scoped, tag = 'prefetched SMEM operand 0']
  %s0 = inlined_call_operand.<no memory space> [shape: s32[1], index: 0, kind: input, shape index: {}]
  %s1 = inlined_call_operand.hbm [shape: f32[32,80], index: 1, kind: input, shape index: {}]
  %s2 = inlined_call_operand.hbm [shape: f32[80,256], index: 2, kind: input, shape index: {}]
  %s3 = inlined_call_operand.hbm [shape: f32[256,256], index: 3, kind: input, shape index: {}]
  %s4 = inlined_call_operand.hbm [shape: f32[32,256], index: 4, kind: output, shape index: {}]
  %s5 = sld [smem:[#allocation0]]
  $region34: #{tpu_custom_call.1} parent=0
    _
  %s7 = ssub.s32 1, %s5
  %s8 = scalar_select 0, %s7, %s5
  %9 = sst [smem:[#allocation3]] %s0
  $region1: #{tpu_custom_call.1} parent=0
    #allocation4 [shape = 'u8[16384]{0}', space=vmem, size = 0x4000, scoped, tag = 'input window, operand 1, single buffered']
    #allocation5 [shape = 's32[1]{0}', space=sflag, size = 0x4, scoped, tag = 'scoped memory for tpu_custom_call.1']
    #allocation6 [shape = 's32[1]{0}', space=sflag, size = 0x4, scoped, tag = 'scoped memory for tpu_custom_call.1']
    #allocation7 [shape = 'u8[81920]{0}', space=vmem, size = 0x14000, scoped, tag = 'input window, operand 2, single buffered']
    #allocation8 [shape = 's32[1]{0}', space=sflag, size = 0x4, scoped, tag = 'scoped memory for tpu_custom_call.1']
    #allocation9 [shape = 'u8[262144]{0}', space=vmem, size = 0x40000, scoped, tag = 'input window, operand 3, single buffered']
    #allocation10 [shape = 'u8[32768]{0}', space=vmem, size = 0x8000, scoped, tag = 'output window, operand 0, single buffered']
    %10 = vsyncpa [#allocation5], 0
    %11 = vsyncpa [#allocation8], 0
    %12 = vsyncpa [#allocation6], 0
    // Predicated region
    $region2: #{tpu_custom_call.1} parent=1 // pred_check
      _
    $region3: #{tpu_custom_call.1} parent=1 // pred_check_branch
      %14 = sbr.rel (0) target = $region5
    $region4: #{tpu_custom_call.1} parent=1 // pred_region
      %16 = vsyncadd [#allocation5], 0
      %s17 = sshll.u32 %s1, 4
      %s18 = int_to_ptr.hbm [resolvable:$true] %s17
      %s19 = sshll.u32 [#allocation4], 4
      %s20 = int_to_ptr.vmem [resolvable:$true] %s19
      %25 = dma.hbm_to_vmem [thread:$0]  %s18, 512, %s20, [#allocation5], 128, 128, 8
    $region5: #{tpu_custom_call.1} parent=1 // pred_fallthru
      _
    // Predicated region
    $region6: #{tpu_custom_call.1} parent=1 // pred_check
      _
    $region7: #{tpu_custom_call.1} parent=1 // pred_check_branch
      %27 = sbr.rel (0) target = $region9
    $region8: #{tpu_custom_call.1} parent=1 // pred_region
      %29 = vsyncadd [#allocation8], 0
      %s30 = sshll.u32 %s2, 4
      %s31 = int_to_ptr.hbm [resolvable:$true] %s30
      %s32 = sshll.u32 [#allocation7], 4
      %s33 = int_to_ptr.vmem [resolvable:$true] %s32
      %38 = dma.hbm_to_vmem [thread:$0]  %s31, 2560, %s33, [#allocation8], 256, 256, 16
    $region9: #{tpu_custom_call.1} parent=1 // pred_fallthru
      _
    // Predicated region
    $region10: #{tpu_custom_call.1} parent=1 // pred_check
      _
    $region11: #{tpu_custom_call.1} parent=1 // pred_check_branch
      %40 = sbr.rel (0) target = $region13
    $region12: #{tpu_custom_call.1} parent=1 // pred_region
      %42 = vsyncadd [#allocation8], 0
      %s43 = sshll.u32 %s3, 4
      %s44 = int_to_ptr.hbm [resolvable:$true] %s43
      %s45 = sshll.u32 [#allocation9], 4
      %s46 = int_to_ptr.vmem [resolvable:$true] %s45
      %51 = dma.hbm_to_vmem [thread:$0]  %s44, 8192, %s46, [#allocation8], 256, 256, 16
    $region13: #{tpu_custom_call.1} parent=1 // pred_fallthru
      _
    // Predicated region
    $region14: #{tpu_custom_call.1} parent=1 // pred_check
      _
    $region15: #{tpu_custom_call.1} parent=1 // pred_check_branch
      %53 = sbr.rel (0) target = $region17
    $region16: #{tpu_custom_call.1} parent=1 // pred_region
      %55 = dma.done [#allocation5], 512
    $region17: #{tpu_custom_call.1} parent=1 // pred_fallthru
      _
    // Predicated region
    $region18: #{tpu_custom_call.1} parent=1 // pred_check
      _
    $region19: #{tpu_custom_call.1} parent=1 // pred_check_branch
      %57 = sbr.rel (0) target = $region21
    $region20: #{tpu_custom_call.1} parent=1 // pred_region
      %59 = dma.done [#allocation8], 2560
    $region21: #{tpu_custom_call.1} parent=1 // pred_fallthru
      _
    // Predicated region
    $region22: #{tpu_custom_call.1} parent=1 // pred_check
      _
    $region23: #{tpu_custom_call.1} parent=1 // pred_check_branch
      %61 = sbr.rel (0) target = $region25
    $region24: #{tpu_custom_call.1} parent=1 // pred_region
      %63 = dma.done [#allocation8], 8192
    $region25: #{tpu_custom_call.1} parent=1 // pred_fallthru
      _
    %v64 = vld [vmem:[#allocation4] sm:$0xff]
    %v65 = vld [vmem:[#allocation4 + $0x8] sm:$0xff]
    %v66 = vld [vmem:[#allocation4 + $0x10] sm:$0xff]
    %v67 = vld [vmem:[#allocation4 + $0x18] sm:$0xff]
    %v68 = vld [vmem:[#allocation7] sm:$0xff]
    %v69 = vld [vmem:[#allocation7 + $0x8] sm:$0xff]
    %v70 = vld [vmem:[#allocation7 + $0x10] sm:$0xff]
    %v71 = vld [vmem:[#allocation7 + $0x18] sm:$0xff]
    %v72 = vld [vmem:[#allocation7 + $0x20] sm:$0xff]
    %v73 = vld [vmem:[#allocation7 + $0x28] sm:$0xff]
    %v74 = vld [vmem:[#allocation7 + $0x30] sm:$0xff]
    %v75 = vld [vmem:[#allocation7 + $0x38] sm:$0xff]
    %v76 = vld [vmem:[#allocation7 + $0x40] sm:$0xff]
    %v77 = vld [vmem:[#allocation7 + $0x48] sm:$0xff]
    %v78 = vld [vmem:[#allocation7 + $0x50] sm:$0xff]
    %v79 = vld [vmem:[#allocation7 + $0x58] sm:$0xff]
    %v80 = vld [vmem:[#allocation7 + $0x60] sm:$0xff]
    %v81 = vld [vmem:[#allocation7 + $0x68] sm:$0xff]
    %v82 = vld [vmem:[#allocation7 + $0x70] sm:$0xff]
    %v83 = vld [vmem:[#allocation7 + $0x78] sm:$0xff]
    %v84 = vld [vmem:[#allocation7 + $0x80] sm:$0xff]
    %v85 = vld [vmem:[#allocation7 + $0x88] sm:$0xff]
    %v86 = vld [vmem:[#allocation7 + $0x90] sm:$0xff]
    %v87 = vld [vmem:[#allocation7 + $0x98] sm:$0xff]
    %vm88 = vcmask 654336
    %v90 = vsel %vm88, %v64, 0
    %v93 = vsel %vm88, %v65, 0
    %v96 = vsel %vm88, %v66, 0
    %v99 = vsel %vm88, %v67, 0
    %101 = vmatpush.msra.mxu0 0.0
    %102 = vmatpush.msra.mxu0 0.0
    %103 = vmatpush.msra.mxu0 0.0
    %104 = vmatpush.msra.mxu0 0.0
    %105 = vmatpush.msra.mxu0 0.0
    %106 = vmatpush.msra.mxu0 0.0
    %107 = vmatpush.msra.mxu0 %v86
    %108 = vmatpush.msra.mxu0 %v84
    %109 = vmatpush.msra.mxu0 %v82
    %110 = vmatpush.msra.mxu0 %v80
    %111 = vmatpush.msra.mxu0 %v78
    %112 = vmatpush.msra.mxu0 %v76
    %113 = vmatpush.msra.mxu0 %v74
    %114 = vmatpush.msra.mxu0 %v72
    %115 = vmatpush.msra.mxu0 %v70
    %116 = vmatpush.msra.mxu0 %v68
    %117 = vmatmul.f32.gmra.mxu0 %v90
    %v118 = vpop.f32.mrf.mxu0
    %v119 = vadd.f32 0.0, %v118
    %120 = vmatmul.f32.gmra.mxu0 %v93
    %v121 = vpop.f32.mrf.mxu0
    %v122 = vadd.f32 0.0, %v121
    %123 = vmatmul.f32.gmra.mxu0 %v96
    %v124 = vpop.f32.mrf.mxu0
    %v125 = vadd.f32 0.0, %v124
    %126 = vmatmul.f32.gmra.mxu0 %v99
    %v127 = vpop.f32.mrf.mxu0
    %v128 = vadd.f32 0.0, %v127
    %129 = vdwg.mxu0
    %130 = vmatpush.msra.mxu0 0.0
    %131 = vmatpush.msra.mxu0 0.0
    %132 = vmatpush.msra.mxu0 0.0
    %133 = vmatpush.msra.mxu0 0.0
    %134 = vmatpush.msra.mxu0 0.0
    %135 = vmatpush.msra.mxu0 0.0
    %136 = vmatpush.msra.mxu0 %v87
    %137 = vmatpush.msra.mxu0 %v85
    %138 = vmatpush.msra.mxu0 %v83
    %139 = vmatpush.msra.mxu0 %v81
    %140 = vmatpush.msra.mxu0 %v79
    %141 = vmatpush.msra.mxu0 %v77
    %142 = vmatpush.msra.mxu0 %v75
    %143 = vmatpush.msra.mxu0 %v73
    %144 = vmatpush.msra.mxu0 %v71
    %145 = vmatpush.msra.mxu0 %v69
    %146 = vmatmul.f32.gmra.mxu0 %v90
    %v147 = vpop.f32.mrf.mxu0
    %v148 = vadd.f32 0.0, %v147
    %149 = vmatmul.f32.gmra.mxu0 %v93
    %v150 = vpop.f32.mrf.mxu0
    %v151 = vadd.f32 0.0, %v150
    %152 = vmatmul.f32.gmra.mxu0 %v96
    %v153 = vpop.f32.mrf.mxu0
    %v154 = vadd.f32 0.0, %v153
    %155 = vmatmul.f32.gmra.mxu0 %v99
    %v156 = vpop.f32.mrf.mxu0
    %v157 = vadd.f32 0.0, %v156
    %158 = vdwg.mxu0
    %v159 = vmax.f32 %v119, 0.0
    %v160 = vmax.f32 %v148, 0.0
    %v161 = vmax.f32 %v122, 0.0
    %v162 = vmax.f32 %v151, 0.0
    %v163 = vmax.f32 %v125, 0.0
    %v164 = vmax.f32 %v154, 0.0
    %v165 = vmax.f32 %v128, 0.0
    %v166 = vmax.f32 %v157, 0.0
    %v167 = vld [vmem:[#allocation9] sm:$0xff]
    %v168 = vld [vmem:[#allocation9 + $0x8] sm:$0xff]
    %v169 = vld [vmem:[#allocation9 + $0x10] sm:$0xff]
    %v170 = vld [vmem:[#allocation9 + $0x18] sm:$0xff]
    %v171 = vld [vmem:[#allocation9 + $0x20] sm:$0xff]
    %v172 = vld [vmem:[#allocation9 + $0x28] sm:$0xff]
    %v173 = vld [vmem:[#allocation9 + $0x30] sm:$0xff]
    %v174 = vld [vmem:[#allocation9 + $0x38] sm:$0xff]
    %v175 = vld [vmem:[#allocation9 + $0x40] sm:$0xff]
    %v176 = vld [vmem:[#allocation9 + $0x48] sm:$0xff]
    %v177 = vld [vmem:[#allocation9 + $0x50] sm:$0xff]
    %v178 = vld [vmem:[#allocation9 + $0x58] sm:$0xff]
    %v179 = vld [vmem:[#allocation9 + $0x60] sm:$0xff]
    %v180 = vld [vmem:[#allocation9 + $0x68] sm:$0xff]
    %v181 = vld [vmem:[#allocation9 + $0x70] sm:$0xff]
    %v182 = vld [vmem:[#allocation9 + $0x78] sm:$0xff]
    %v183 = vld [vmem:[#allocation9 + $0x80] sm:$0xff]
    %v184 = vld [vmem:[#allocation9 + $0x88] sm:$0xff]
    %v185 = vld [vmem:[#allocation9 + $0x90] sm:$0xff]
    %v186 = vld [vmem:[#allocation9 + $0x98] sm:$0xff]
    %v187 = vld [vmem:[#allocation9 + $0xa0] sm:$0xff]
    %v188 = vld [vmem:[#allocation9 + $0xa8] sm:$0xff]
    %v189 = vld [vmem:[#allocation9 + $0xb0] sm:$0xff]
    %v190 = vld [vmem:[#allocation9 + $0xb8] sm:$0xff]
    %v191 = vld [vmem:[#allocation9 + $0xc0] sm:$0xff]
    %v192 = vld [vmem:[#allocation9 + $0xc8] sm:$0xff]
    %v193 = vld [vmem:[#allocation9 + $0xd0] sm:$0xff]
    %v194 = vld [vmem:[#allocation9 + $0xd8] sm:$0xff]
    %v195 = vld [vmem:[#allocation9 + $0xe0] sm:$0xff]
    %v196 = vld [vmem:[#allocation9 + $0xe8] sm:$0xff]
    %v197 = vld [vmem:[#allocation9 + $0xf0] sm:$0xff]
    %v198 = vld [vmem:[#allocation9 + $0xf8] sm:$0xff]
    %v199 = vld [vmem:[#allocation9 + $0x100] sm:$0xff]
    %v200 = vld [vmem:[#allocation9 + $0x108] sm:$0xff]
    %v201 = vld [vmem:[#allocation9 + $0x110] sm:$0xff]
    %v202 = vld [vmem:[#allocation9 + $0x118] sm:$0xff]
    %v203 = vld [vmem:[#allocation9 + $0x120] sm:$0xff]
    %v204 = vld [vmem:[#allocation9 + $0x128] sm:$0xff]
    %v205 = vld [vmem:[#allocation9 + $0x130] sm:$0xff]
    %v206 = vld [vmem:[#allocation9 + $0x138] sm:$0xff]
    %v207 = vld [vmem:[#allocation9 + $0x140] sm:$0xff]
    %v208 = vld [vmem:[#allocation9 + $0x148] sm:$0xff]
    %v209 = vld [vmem:[#allocation9 + $0x150] sm:$0xff]
    %v210 = vld [vmem:[#allocation9 + $0x158] sm:$0xff]
    %v211 = vld [vmem:[#allocation9 + $0x160] sm:$0xff]
    %v212 = vld [vmem:[#allocation9 + $0x168] sm:$0xff]
    %v213 = vld [vmem:[#allocation9 + $0x170] sm:$0xff]
    %v214 = vld [vmem:[#allocation9 + $0x178] sm:$0xff]
    %v215 = vld [vmem:[#allocation9 + $0x180] sm:$0xff]
    %v216 = vld [vmem:[#allocation9 + $0x188] sm:$0xff]
    %v217 = vld [vmem:[#allocation9 + $0x190] sm:$0xff]
    %v218 = vld [vmem:[#allocation9 + $0x198] sm:$0xff]
    %v219 = vld [vmem:[#allocation9 + $0x1a0] sm:$0xff]
    %v220 = vld [vmem:[#allocation9 + $0x1a8] sm:$0xff]
    %v221 = vld [vmem:[#allocation9 + $0x1b0] sm:$0xff]
    %v222 = vld [vmem:[#allocation9 + $0x1b8] sm:$0xff]
    %v223 = vld [vmem:[#allocation9 + $0x1c0] sm:$0xff]
    %v224 = vld [vmem:[#allocation9 + $0x1c8] sm:$0xff]
    %v225 = vld [vmem:[#allocation9 + $0x1d0] sm:$0xff]
    %v226 = vld [vmem:[#allocation9 + $0x1d8] sm:$0xff]
    %v227 = vld [vmem:[#allocation9 + $0x1e0] sm:$0xff]
    %v228 = vld [vmem:[#allocation9 + $0x1e8] sm:$0xff]
    %v229 = vld [vmem:[#allocation9 + $0x1f0] sm:$0xff]
    %v230 = vld [vmem:[#allocation9 + $0x1f8] sm:$0xff]
    %231 = vmatpush.msra.mxu0 %v197
    %232 = vmatpush.msra.mxu0 %v195
    %233 = vmatpush.msra.mxu0 %v193
    %234 = vmatpush.msra.mxu0 %v191
    %235 = vmatpush.msra.mxu0 %v189
    %236 = vmatpush.msra.mxu0 %v187
    %237 = vmatpush.msra.mxu0 %v185
    %238 = vmatpush.msra.mxu0 %v183
    %239 = vmatpush.msra.mxu0 %v181
    %240 = vmatpush.msra.mxu0 %v179
    %241 = vmatpush.msra.mxu0 %v177
    %242 = vmatpush.msra.mxu0 %v175
    %243 = vmatpush.msra.mxu0 %v173
    %244 = vmatpush.msra.mxu0 %v171
    %245 = vmatpush.msra.mxu0 %v169
    %246 = vmatpush.msra.mxu0 %v167
    %247 = vmatmul.f32.gmra.mxu0 %v159
    %v248 = vpop.f32.mrf.mxu0
    %v249 = vadd.f32 0.0, %v248
    %250 = vmatmul.f32.gmra.mxu0 %v161
    %v251 = vpop.f32.mrf.mxu0
    %v252 = vadd.f32 0.0, %v251
    %253 = vmatmul.f32.gmra.mxu0 %v163
    %v254 = vpop.f32.mrf.mxu0
    %v255 = vadd.f32 0.0, %v254
    %256 = vmatmul.f32.gmra.mxu0 %v165
    %v257 = vpop.f32.mrf.mxu0
    %v258 = vadd.f32 0.0, %v257
    %259 = vdwg.mxu0
    %260 = vmatpush.msra.mxu0 %v229
    %261 = vmatpush.msra.mxu0 %v227
    %262 = vmatpush.msra.mxu0 %v225
    %263 = vmatpush.msra.mxu0 %v223
    %264 = vmatpush.msra.mxu0 %v221
    %265 = vmatpush.msra.mxu0 %v219
    %266 = vmatpush.msra.mxu0 %v217
    %267 = vmatpush.msra.mxu0 %v215
    %268 = vmatpush.msra.mxu0 %v213
    %269 = vmatpush.msra.mxu0 %v211
    %270 = vmatpush.msra.mxu0 %v209
    %271 = vmatpush.msra.mxu0 %v207
    %272 = vmatpush.msra.mxu0 %v205
    %273 = vmatpush.msra.mxu0 %v203
    %274 = vmatpush.msra.mxu0 %v201
    %275 = vmatpush.msra.mxu0 %v199
    %276 = vmatmul.f32.gmra.mxu0 %v160
    %v277 = vpop.f32.mrf.mxu0
    %v278 = vadd.f32 %v249, %v277
    %279 = vmatmul.f32.gmra.mxu0 %v162
    %v280 = vpop.f32.mrf.mxu0
    %v281 = vadd.f32 %v252, %v280
    %282 = vmatmul.f32.gmra.mxu0 %v164
    %v283 = vpop.f32.mrf.mxu0
    %v284 = vadd.f32 %v255, %v283
    %285 = vmatmul.f32.gmra.mxu0 %v166
    %v286 = vpop.f32.mrf.mxu0
    %v287 = vadd.f32 %v258, %v286
    %288 = vdwg.mxu0
    %289 = vmatpush.msra.mxu0 %v198
    %290 = vmatpush.msra.mxu0 %v196
    %291 = vmatpush.msra.mxu0 %v194
    %292 = vmatpush.msra.mxu0 %v192
    %293 = vmatpush.msra.mxu0 %v190
    %294 = vmatpush.msra.mxu0 %v188
    %295 = vmatpush.msra.mxu0 %v186
    %296 = vmatpush.msra.mxu0 %v184
    %297 = vmatpush.msra.mxu0 %v182
    %298 = vmatpush.msra.mxu0 %v180
    %299 = vmatpush.msra.mxu0 %v178
    %300 = vmatpush.msra.mxu0 %v176
    %301 = vmatpush.msra.mxu0 %v174
    %302 = vmatpush.msra.mxu0 %v172
    %303 = vmatpush.msra.mxu0 %v170
    %304 = vmatpush.msra.mxu0 %v168
    %305 = vmatmul.f32.gmra.mxu0 %v159
    %v306 = vpop.f32.mrf.mxu0
    %v307 = vadd.f32 0.0, %v306
    %308 = vmatmul.f32.gmra.mxu0 %v161
    %v309 = vpop.f32.mrf.mxu0
    %v310 = vadd.f32 0.0, %v309
    %311 = vmatmul.f32.gmra.mxu0 %v163
    %v312 = vpop.f32.mrf.mxu0
    %v313 = vadd.f32 0.0, %v312
    %314 = vmatmul.f32.gmra.mxu0 %v165
    %v315 = vpop.f32.mrf.mxu0
    %v316 = vadd.f32 0.0, %v315
    %317 = vdwg.mxu0
    %318 = vmatpush.msra.mxu0 %v230
    %319 = vmatpush.msra.mxu0 %v228
    %320 = vmatpush.msra.mxu0 %v226
    %321 = vmatpush.msra.mxu0 %v224
    %322 = vmatpush.msra.mxu0 %v222
    %323 = vmatpush.msra.mxu0 %v220
    %324 = vmatpush.msra.mxu0 %v218
    %325 = vmatpush.msra.mxu0 %v216
    %326 = vmatpush.msra.mxu0 %v214
    %327 = vmatpush.msra.mxu0 %v212
    %328 = vmatpush.msra.mxu0 %v210
    %329 = vmatpush.msra.mxu0 %v208
    %330 = vmatpush.msra.mxu0 %v206
    %331 = vmatpush.msra.mxu0 %v204
    %332 = vmatpush.msra.mxu0 %v202
    %333 = vmatpush.msra.mxu0 %v200
    %334 = vmatmul.f32.gmra.mxu0 %v160
    %v335 = vpop.f32.mrf.mxu0
    %v336 = vadd.f32 %v307, %v335
    %337 = vmatmul.f32.gmra.mxu0 %v162
    %v338 = vpop.f32.mrf.mxu0
    %v339 = vadd.f32 %v310, %v338
    %340 = vmatmul.f32.gmra.mxu0 %v164
    %v341 = vpop.f32.mrf.mxu0
    %v342 = vadd.f32 %v313, %v341
    %343 = vmatmul.f32.gmra.mxu0 %v166
    %v344 = vpop.f32.mrf.mxu0
    %v345 = vadd.f32 %v316, %v344
    %346 = vdwg.mxu0
    %v347 = vmax.f32 %v278, 0.0
    %v348 = vmax.f32 %v336, 0.0
    %v349 = vmax.f32 %v281, 0.0
    %v350 = vmax.f32 %v339, 0.0
    %v351 = vmax.f32 %v284, 0.0
    %v352 = vmax.f32 %v342, 0.0
    %v353 = vmax.f32 %v287, 0.0
    %v354 = vmax.f32 %v345, 0.0
    %355 = vst [vmem:[#allocation10] sm:$0xff] %v347
    %356 = vst [vmem:[#allocation10 + $0x8] sm:$0xff] %v348
    %357 = vst [vmem:[#allocation10 + $0x10] sm:$0xff] %v349
    %358 = vst [vmem:[#allocation10 + $0x18] sm:$0xff] %v350
    %359 = vst [vmem:[#allocation10 + $0x20] sm:$0xff] %v351
    %360 = vst [vmem:[#allocation10 + $0x28] sm:$0xff] %v352
    %361 = vst [vmem:[#allocation10 + $0x30] sm:$0xff] %v353
    %362 = vst [vmem:[#allocation10 + $0x38] sm:$0xff] %v354
    // Predicated region
    $region26: #{tpu_custom_call.1} parent=1 // pred_check
      _
    $region27: #{tpu_custom_call.1} parent=1 // pred_check_branch
      %364 = sbr.rel (0) target = $region29
    $region28: #{tpu_custom_call.1} parent=1 // pred_region
      %366 = vsyncadd [#allocation6], 0
      %s367 = sshll.u32 [#allocation10], 4
      %s368 = int_to_ptr.vmem [resolvable:$true] %s367
      %s369 = sshll.u32 %s4, 4
      %s370 = int_to_ptr.hbm [resolvable:$true] %s369
      %375 = dma.vmem_to_hbm [thread:$0]  %s368, 1024, %s370, [#allocation6], 256, 256, 16
    $region29: #{tpu_custom_call.1} parent=1 // pred_fallthru
      _
    // Predicated region
    $region30: #{tpu_custom_call.1} parent=1 // pred_check
      _
    $region31: #{tpu_custom_call.1} parent=1 // pred_check_branch
      %377 = sbr.rel (0) target = $region33
    $region32: #{tpu_custom_call.1} parent=1 // pred_region
      %379 = dma.done [#allocation6], 1024
    $region33: #{tpu_custom_call.1} parent=1 // pred_fallthru
      _
    %380 = vsyncpa [#allocation5], 1
    %381 = vsyncpa [#allocation8], 1
    %382 = vsyncpa [#allocation6], 1

</llo_original>
